<compile_context>
chip_gen: v5e
topology: v5e:2x2
jax: 0.10.0
libtpu: 0.0.40
codegen_flags: <defaults>
</compile_context>

<pallas_src>
import functools

import jax
import jax.numpy as jnp
from jax.experimental import pallas as pl
from jax.experimental.pallas import tpu as pltpu

INPUT_DIM = 5
HIDDEN_DIM1 = 64
HIDDEN_DIM2 = 64
OUTPUT_DIM = 2

K_PAD = 8          # fc1 contraction dim padded to one sublane (5 -> 8)
OUT_PAD = 8        # fc3 output dim padded to one sublane  (2 -> 8)
TB_MAX = 4096      # max batch tile (lanes); VMEM per step stays well under limits


def _cdiv(a, b):
    return (a + b - 1) // b


def _round_up(n, m):
    return ((n + m - 1) // m) * m


def mlp_kernel(xt_ref, w1_ref, b1_ref, w2_ref, b2_ref, w3_ref, b3_ref, o_ref):
    # Activations are (features, TB): features on sublanes, batch on lanes.
    xt = xt_ref[...]                                                   # (K_PAD, TB)

    # fc1 + ReLU
    h1 = jnp.dot(w1_ref[...], xt, preferred_element_type=jnp.float32)  # (64, TB)
    h1 = jnp.maximum(h1 + b1_ref[...], 0.0)

    # fc2 + ReLU
    h2 = jnp.dot(w2_ref[...], h1, preferred_element_type=jnp.float32)  # (64, TB)
    h2 = jnp.maximum(h2 + b2_ref[...], 0.0)

    # fc3 (no activation)
    out = jnp.dot(w3_ref[...], h2, preferred_element_type=jnp.float32) # (OUT_PAD, TB)
    o_ref[...] = (out + b3_ref[...]).astype(o_ref.dtype)


def prepare_params(params):
    """One-time padding / reshaping of PyTorch-layout params (w: (out,in), b: (out,))."""
    w1, b1, w2, b2, w3, b3 = params
    w1p = jnp.pad(w1, ((0, 0), (0, K_PAD - INPUT_DIM)))                 # (64, 8)
    b1p = b1.reshape(HIDDEN_DIM1, 1)                                    # (64, 1)
    w2p = w2                                                            # (64, 64)
    b2p = b2.reshape(HIDDEN_DIM2, 1)                                    # (64, 1)
    w3p = jnp.pad(w3, ((0, OUT_PAD - OUTPUT_DIM), (0, 0)))              # (8, 64)
    b3p = jnp.pad(b3, (0, OUT_PAD - OUTPUT_DIM)).reshape(OUT_PAD, 1)    # (8, 1)
    return (w1p, b1p, w2p, b2p, w3p, b3p)


@jax.jit
def neural_network_forward(x, prepared_params):
    """x: (B, INPUT_DIM) float32. Returns (B, OUTPUT_DIM) float32."""
    w1p, b1p, w2p, b2p, w3p, b3p = prepared_params
    B = x.shape[0]

    # Balanced batch tiles (multiple of 128 lanes) to minimize pad waste; at least
    # two grid steps for large B so both TensorCores on v7x are fed.
    min_tiles = 2 if B >= 512 else 1
    num_tiles = max(min_tiles, _cdiv(B, TB_MAX))
    TB = _round_up(_cdiv(B, num_tiles), 128)
    Bp = TB * num_tiles
    grid = (num_tiles,)

    # Transpose + pad x once: (B, 5) -> (K_PAD, Bp). Zero pad rows/cols are inert.
    xt = jnp.pad(x.T, ((0, K_PAD - INPUT_DIM), (0, Bp - B)))

    # Advisory cost estimate reflecting the padded work actually performed.
    flops = 2 * Bp * (K_PAD * HIDDEN_DIM1
                      + HIDDEN_DIM1 * HIDDEN_DIM2
                      + HIDDEN_DIM2 * OUT_PAD)
    weight_bytes = 4 * (K_PAD * HIDDEN_DIM1 + HIDDEN_DIM1
                        + HIDDEN_DIM1 * HIDDEN_DIM2 + HIDDEN_DIM2
                        + HIDDEN_DIM2 * OUT_PAD + OUT_PAD)
    bytes_accessed = 4 * Bp * (K_PAD + OUT_PAD) + weight_bytes
    cost = pl.CostEstimate(flops=flops, transcendentals=0,
                           bytes_accessed=bytes_accessed)

    out_t = pl.pallas_call(
        mlp_kernel,
        out_shape=jax.ShapeDtypeStruct((OUT_PAD, Bp), jnp.float32),
        grid=grid,
        in_specs=[
            # x tile marches over the batch (lane) dim.
            pl.BlockSpec((K_PAD, TB), lambda i: (0, i)),
            # Weights / biases: constant block index -> DMA once, stay resident.
            pl.BlockSpec((HIDDEN_DIM1, K_PAD), lambda i: (0, 0)),
            pl.BlockSpec((HIDDEN_DIM1, 1), lambda i: (0, 0)),
            pl.BlockSpec((HIDDEN_DIM2, HIDDEN_DIM1), lambda i: (0, 0)),
            pl.BlockSpec((HIDDEN_DIM2, 1), lambda i: (0, 0)),
            pl.BlockSpec((OUT_PAD, HIDDEN_DIM2), lambda i: (0, 0)),
            pl.BlockSpec((OUT_PAD, 1), lambda i: (0, 0)),
        ],
        out_specs=pl.BlockSpec((OUT_PAD, TB), lambda i: (0, i)),
        compiler_params=pltpu.CompilerParams(
            dimension_semantics=("parallel",),   # both TCs on v7x; no-op on v5e/v6e
        ),
        cost_estimate=cost,
    )(xt, w1p, b1p, w2p, b2p, w3p, b3p)

    # (OUT_PAD, Bp) -> (B, OUTPUT_DIM)
    return out_t[:OUTPUT_DIM, :B].T


def init_params(key):
    """PyTorch-layout params: w (out, in), b (out,), init like nn.Linear default."""
    ks = jax.random.split(key, 6)

    def linear(kw, kb, fan_in, fan_out):
        bound = 1.0 / jnp.sqrt(jnp.float32(fan_in))
        w = jax.random.uniform(kw, (fan_out, fan_in), jnp.float32, -bound, bound)
        b = jax.random.uniform(kb, (fan_out,), jnp.float32, -bound, bound)
        return w, b

    w1, b1 = linear(ks[0], ks[1], INPUT_DIM, HIDDEN_DIM1)
    w2, b2 = linear(ks[2], ks[3], HIDDEN_DIM1, HIDDEN_DIM2)
    w3, b3 = linear(ks[4], ks[5], HIDDEN_DIM2, OUTPUT_DIM)
    return (w1, b1, w2, b2, w3, b3)


def reference_forward(x, params):
    w1, b1, w2, b2, w3, b3 = params
    h1 = jnp.maximum(x @ w1.T + b1, 0.0)
    h2 = jnp.maximum(h1 @ w2.T + b2, 0.0)
    return h2 @ w3.T + b3


if __name__ == "__main__":
    key = jax.random.PRNGKey(0)
    k_x, k_p = jax.random.split(key)

    params = init_params(k_p)
    prepared = prepare_params(params)

    # Small batch (single grid step, heavy lane padding path).
    batch = 8
    x = jax.random.normal(k_x, (batch, INPUT_DIM), jnp.float32)
    out = jax.block_until_ready(neural_network_forward(x, prepared))
    ref = reference_forward(x, params)
    assert out.shape == (batch, OUTPUT_DIM)
    assert jnp.allclose(out, ref, atol=1e-5, rtol=1e-5)

    # Larger, non-multiple-of-tile batch exercises the multi-step grid + padding path.
    batch2 = 3000
    x2 = jax.random.normal(k_x, (batch2, INPUT_DIM), jnp.float32)
    out2 = jax.block_until_ready(neural_network_forward(x2, prepared))
    ref2 = reference_forward(x2, params)
    assert out2.shape == (batch2, OUTPUT_DIM)
    assert jnp.allclose(out2, ref2, atol=1e-4, rtol=1e-4)

    print("KERNEL_OK")
</pallas_src>

<mosaic_0001>
module attributes {stable_mosaic.version = 11 : i64} {
  func.func @mlp_kernel(%arg0: i32, %arg1: memref<8x128xf32, #tpu.memory_space<vmem>>, %arg2: memref<64x8xf32, #tpu.memory_space<vmem>>, %arg3: memref<64x1xf32, #tpu.memory_space<vmem>>, %arg4: memref<64x64xf32, #tpu.memory_space<vmem>>, %arg5: memref<64x1xf32, #tpu.memory_space<vmem>>, %arg6: memref<8x64xf32, #tpu.memory_space<vmem>>, %arg7: memref<8x1xf32, #tpu.memory_space<vmem>>, %arg8: memref<8x128xf32, #tpu.memory_space<vmem>>) attributes {dimension_semantics = [#tpu.dimension_semantics<parallel>], iteration_bounds = array<i64: 1>, scalar_prefetch = 0 : i64, scratch_operands = 0 : i64, tpu.core_type = #tpu.core_type<tc>, window_params = [{transform_indices = @transform_0, window_bounds = array<i64: 8, 128>}, {pipeline_mode = #tpu.pipeline_mode<synchronous>, transform_indices = @transform_1, window_bounds = array<i64: 64, 8>}, {pipeline_mode = #tpu.pipeline_mode<synchronous>, transform_indices = @transform_2, window_bounds = array<i64: 64, 1>}, {pipeline_mode = #tpu.pipeline_mode<synchronous>, transform_indices = @transform_3, window_bounds = array<i64: 64, 64>}, {pipeline_mode = #tpu.pipeline_mode<synchronous>, transform_indices = @transform_4, window_bounds = array<i64: 64, 1>}, {pipeline_mode = #tpu.pipeline_mode<synchronous>, transform_indices = @transform_5, window_bounds = array<i64: 8, 64>}, {pipeline_mode = #tpu.pipeline_mode<synchronous>, transform_indices = @transform_6, window_bounds = array<i64: 8, 1>}, {transform_indices = @transform_7, window_bounds = array<i64: 8, 128>}]} {
    %c0 = arith.constant 0 : index
    %c0_0 = arith.constant 0 : index
    %0 = vector.load %arg1[%c0, %c0_0] : memref<8x128xf32, #tpu.memory_space<vmem>>, vector<8x128xf32>
    %c0_1 = arith.constant 0 : index
    %c0_2 = arith.constant 0 : index
    %1 = vector.load %arg2[%c0_1, %c0_2] : memref<64x8xf32, #tpu.memory_space<vmem>>, vector<64x8xf32>
    %cst = arith.constant dense<0.000000e+00> : vector<64x128xf32>
    %2 = tpu.matmul %1, %0, %cst {dimension_numbers = #tpu.dot_dimension_numbers<[1], [0], [0], [1], [0, 0, 1, 1], [], []>} : vector<64x8xf32>, vector<8x128xf32>, vector<64x128xf32> -> vector<64x128xf32>
    %c0_3 = arith.constant 0 : index
    %c0_4 = arith.constant 0 : index
    %3 = vector.load %arg3[%c0_3, %c0_4] : memref<64x1xf32, #tpu.memory_space<vmem>>, vector<64x1xf32>
    %4 = vector.broadcast %3 : vector<64x1xf32> to vector<64x128xf32>
    %5 = arith.addf %2, %4 : vector<64x128xf32>
    %cst_5 = arith.constant 0.000000e+00 : f32
    %6 = vector.broadcast %cst_5 : f32 to vector<64x128xf32>
    %7 = arith.maximumf %5, %6 : vector<64x128xf32>
    %c0_6 = arith.constant 0 : index
    %c0_7 = arith.constant 0 : index
    %8 = vector.load %arg4[%c0_6, %c0_7] : memref<64x64xf32, #tpu.memory_space<vmem>>, vector<64x64xf32>
    %cst_8 = arith.constant dense<0.000000e+00> : vector<64x128xf32>
    %9 = tpu.matmul %8, %7, %cst_8 {dimension_numbers = #tpu.dot_dimension_numbers<[1], [0], [0], [1], [0, 0, 1, 1], [], []>} : vector<64x64xf32>, vector<64x128xf32>, vector<64x128xf32> -> vector<64x128xf32>
    %c0_9 = arith.constant 0 : index
    %c0_10 = arith.constant 0 : index
    %10 = vector.load %arg5[%c0_9, %c0_10] : memref<64x1xf32, #tpu.memory_space<vmem>>, vector<64x1xf32>
    %11 = vector.broadcast %10 : vector<64x1xf32> to vector<64x128xf32>
    %12 = arith.addf %9, %11 : vector<64x128xf32>
    %cst_11 = arith.constant 0.000000e+00 : f32
    %13 = vector.broadcast %cst_11 : f32 to vector<64x128xf32>
    %14 = arith.maximumf %12, %13 : vector<64x128xf32>
    %c0_12 = arith.constant 0 : index
    %c0_13 = arith.constant 0 : index
    %15 = vector.load %arg6[%c0_12, %c0_13] : memref<8x64xf32, #tpu.memory_space<vmem>>, vector<8x64xf32>
    %cst_14 = arith.constant dense<0.000000e+00> : vector<8x128xf32>
    %16 = tpu.matmul %15, %14, %cst_14 {dimension_numbers = #tpu.dot_dimension_numbers<[1], [0], [0], [1], [0, 0, 1, 1], [], []>} : vector<8x64xf32>, vector<64x128xf32>, vector<8x128xf32> -> vector<8x128xf32>
    %c0_15 = arith.constant 0 : index
    %c0_16 = arith.constant 0 : index
    %17 = vector.load %arg7[%c0_15, %c0_16] : memref<8x1xf32, #tpu.memory_space<vmem>>, vector<8x1xf32>
    %18 = vector.broadcast %17 : vector<8x1xf32> to vector<8x128xf32>
    %19 = arith.addf %16, %18 : vector<8x128xf32>
    %c0_17 = arith.constant 0 : index
    %c0_18 = arith.constant 0 : index
    %20 = vector.load %arg8[%c0_17, %c0_18] : memref<8x128xf32, #tpu.memory_space<vmem>>, vector<8x128xf32>
    tpu.vector_store %arg8[%c0_17, %c0_18], %19 {strides = array<i32>} : memref<8x128xf32, #tpu.memory_space<vmem>>, vector<8x128xf32>,
    return
  }
  func.func @transform_0(%arg0: i32) -> (i32, i32) {
    %c0_i32 = arith.constant 0 : i32
    %c0_i32_0 = arith.constant 0 : i32
    return %c0_i32, %arg0 : i32, i32
  }
  func.func @transform_1(%arg0: i32) -> (i32, i32) {
    %c0_i32 = arith.constant 0 : i32
    %c0_i32_0 = arith.constant 0 : i32
    %c0_i32_1 = arith.constant 0 : i32
    return %c0_i32, %c0_i32_0 : i32, i32
  }
  func.func @transform_2(%arg0: i32) -> (i32, i32) {
    %c0_i32 = arith.constant 0 : i32
    %c0_i32_0 = arith.constant 0 : i32
    %c0_i32_1 = arith.constant 0 : i32
    return %c0_i32, %c0_i32_0 : i32, i32
  }
  func.func @transform_3(%arg0: i32) -> (i32, i32) {
    %c0_i32 = arith.constant 0 : i32
    %c0_i32_0 = arith.constant 0 : i32
    %c0_i32_1 = arith.constant 0 : i32
    return %c0_i32, %c0_i32_0 : i32, i32
  }
  func.func @transform_4(%arg0: i32) -> (i32, i32) {
    %c0_i32 = arith.constant 0 : i32
    %c0_i32_0 = arith.constant 0 : i32
    %c0_i32_1 = arith.constant 0 : i32
    return %c0_i32, %c0_i32_0 : i32, i32
  }
  func.func @transform_5(%arg0: i32) -> (i32, i32) {
    %c0_i32 = arith.constant 0 : i32
    %c0_i32_0 = arith.constant 0 : i32
    %c0_i32_1 = arith.constant 0 : i32
    return %c0_i32, %c0_i32_0 : i32, i32
  }
  func.func @transform_6(%arg0: i32) -> (i32, i32) {
    %c0_i32 = arith.constant 0 : i32
    %c0_i32_0 = arith.constant 0 : i32
    %c0_i32_1 = arith.constant 0 : i32
    return %c0_i32, %c0_i32_0 : i32, i32
  }
  func.func @transform_7(%arg0: i32) -> (i32, i32) {
    %c0_i32 = arith.constant 0 : i32
    %c0_i32_0 = arith.constant 0 : i32
    return %c0_i32, %arg0 : i32, i32
  }
}

</mosaic_0001>

<llo_original>
// kernel: neural_network_forward.1
$region0: #{neural_network_forward.1}
  #allocation0 [shape = 'u32[]', space=smem, size = 0x4, offset = 0x4, fixed_abs, tag = 'smem constant byte address 0x4 - core index']
  #allocation1 [shape = 'u32[72,128]{1,0:T(1,128)}', space=vmem, size = 0x9000, scoped, tag = 'internal scratch']
  %s0 = inlined_call_operand.vmem [shape: f32[8,128], index: 0, kind: input, shape index: {}]
  %s1 = inlined_call_operand.vmem [shape: f32[64,8], index: 1, kind: input, shape index: {}]
  %s2 = inlined_call_operand.vmem [shape: f32[64,1], index: 2, kind: input, shape index: {}]
  %s3 = inlined_call_operand.vmem [shape: f32[64,64], index: 3, kind: input, shape index: {}]
  %s4 = inlined_call_operand.vmem [shape: f32[64,1], index: 4, kind: input, shape index: {}]
  %s5 = inlined_call_operand.vmem [shape: f32[8,64], index: 5, kind: input, shape index: {}]
  %s6 = inlined_call_operand.vmem [shape: f32[8,1], index: 6, kind: input, shape index: {}]
  %s7 = inlined_call_operand.vmem [shape: f32[8,128], index: 7, kind: output, shape index: {}]
  %s8 = sld [smem:[#allocation0]]
  $region38: #{neural_network_forward.1} parent=0
    _
  %s10 = ssub.s32 1, %s8
  %s11 = scalar_select 0, %s10, %s8
  // Predicated region
  $region2: #{neural_network_forward.1} parent=0 // pred_check
    _
  $region3: #{neural_network_forward.1} parent=0 // pred_check_branch
    %13 = sbr.rel (0) target = $region5
  $region4: #{neural_network_forward.1} parent=0 // pred_region
    _
  $region5: #{neural_network_forward.1} parent=0 // pred_fallthru
    _
  // Predicated region
  $region6: #{neural_network_forward.1} parent=0 // pred_check
    _
  $region7: #{neural_network_forward.1} parent=0 // pred_check_branch
    %15 = sbr.rel (0) target = $region9
  $region8: #{neural_network_forward.1} parent=0 // pred_region
    _
  $region9: #{neural_network_forward.1} parent=0 // pred_fallthru
    _
  // Predicated region
  $region10: #{neural_network_forward.1} parent=0 // pred_check
    _
  $region11: #{neural_network_forward.1} parent=0 // pred_check_branch
    %17 = sbr.rel (0) target = $region13
  $region12: #{neural_network_forward.1} parent=0 // pred_region
    _
  $region13: #{neural_network_forward.1} parent=0 // pred_fallthru
    _
  // Predicated region
  $region14: #{neural_network_forward.1} parent=0 // pred_check
    _
  $region15: #{neural_network_forward.1} parent=0 // pred_check_branch
    %19 = sbr.rel (0) target = $region17
  $region16: #{neural_network_forward.1} parent=0 // pred_region
    _
  $region17: #{neural_network_forward.1} parent=0 // pred_fallthru
    _
  // Predicated region
  $region18: #{neural_network_forward.1} parent=0 // pred_check
    _
  $region19: #{neural_network_forward.1} parent=0 // pred_check_branch
    %21 = sbr.rel (0) target = $region21
  $region20: #{neural_network_forward.1} parent=0 // pred_region
    _
  $region21: #{neural_network_forward.1} parent=0 // pred_fallthru
    _
  // Predicated region
  $region22: #{neural_network_forward.1} parent=0 // pred_check
    _
  $region23: #{neural_network_forward.1} parent=0 // pred_check_branch
    %23 = sbr.rel (0) target = $region25
  $region24: #{neural_network_forward.1} parent=0 // pred_region
    _
  $region25: #{neural_network_forward.1} parent=0 // pred_fallthru
    _
  // Predicated region
  $region26: #{neural_network_forward.1} parent=0 // pred_check
    _
  $region27: #{neural_network_forward.1} parent=0 // pred_check_branch
    %25 = sbr.rel (0) target = $region29
  $region28: #{neural_network_forward.1} parent=0 // pred_region
    _
  $region29: #{neural_network_forward.1} parent=0 // pred_fallthru
    _
  %v26 = vld [vmem:[%s0] sm:$0xff]
  %v27 = vld [vmem:[%s1] sm:$0xff]
  %v28 = vld [vmem:[%s1 + $0x8] sm:$0xff]
  %v29 = vld [vmem:[%s1 + $0x10] sm:$0xff]
  %v30 = vld [vmem:[%s1 + $0x18] sm:$0xff]
  %v31 = vld [vmem:[%s1 + $0x20] sm:$0xff]
  %v32 = vld [vmem:[%s1 + $0x28] sm:$0xff]
  %v33 = vld [vmem:[%s1 + $0x30] sm:$0xff]
  %v34 = vld [vmem:[%s1 + $0x38] sm:$0xff]
  %v35 = vld [vmem:[%s2] sm:$0xff]
  %v36 = vld [vmem:[%s2 + $0x8] sm:$0xff]
  %v37 = vld [vmem:[%s2 + $0x10] sm:$0xff]
  %v38 = vld [vmem:[%s2 + $0x18] sm:$0xff]
  %v39 = vld [vmem:[%s2 + $0x20] sm:$0xff]
  %v40 = vld [vmem:[%s2 + $0x28] sm:$0xff]
  %v41 = vld [vmem:[%s2 + $0x30] sm:$0xff]
  %v42 = vld [vmem:[%s2 + $0x38] sm:$0xff]
  %44 = vset.pattern.permute.xlu0 0
  %45 = vperm.xlu0 %44, %v35
  %v46 = vpop.permute.xlu0 %45
  %49 = vset.pattern.permute.xlu0 0
  %50 = vperm.xlu0 %49, %v36
  %v51 = vpop.permute.xlu0 %50
  %54 = vset.pattern.permute.xlu0 0
  %55 = vperm.xlu0 %54, %v37
  %v56 = vpop.permute.xlu0 %55
  %59 = vset.pattern.permute.xlu0 0
  %60 = vperm.xlu0 %59, %v38
  %v61 = vpop.permute.xlu0 %60
  %64 = vset.pattern.permute.xlu0 0
  %65 = vperm.xlu0 %64, %v39
  %v66 = vpop.permute.xlu0 %65
  %69 = vset.pattern.permute.xlu0 0
  %70 = vperm.xlu0 %69, %v40
  %v71 = vpop.permute.xlu0 %70
  %74 = vset.pattern.permute.xlu0 0
  %75 = vperm.xlu0 %74, %v41
  %v76 = vpop.permute.xlu0 %75
  %79 = vset.pattern.permute.xlu0 0
  %80 = vperm.xlu0 %79, %v42
  %v81 = vpop.permute.xlu0 %80
  %vm83 = vcmask 64512
  %v85 = vsel %vm83, %v27, 0
  %v88 = vsel %vm83, %v28, 0
  %v91 = vsel %vm83, %v29, 0
  %v94 = vsel %vm83, %v30, 0
  %v97 = vsel %vm83, %v31, 0
  %v100 = vsel %vm83, %v32, 0
  %v103 = vsel %vm83, %v33, 0
  %v106 = vsel %vm83, %v34, 0
  %108 = vmatpush.msra.mxu0 0.0
  %109 = vmatpush.msra.mxu0 0.0
  %110 = vmatpush.msra.mxu0 0.0
  %111 = vmatpush.msra.mxu0 0.0
  %112 = vmatpush.msra.mxu0 0.0
  %113 = vmatpush.msra.mxu0 0.0
  %114 = vmatpush.msra.mxu0 0.0
  %115 = vmatpush.msra.mxu0 0.0
  %116 = vmatpush.msra.mxu0 0.0
  %117 = vmatpush.msra.mxu0 0.0
  %118 = vmatpush.msra.mxu0 0.0
  %119 = vmatpush.msra.mxu0 0.0
  %120 = vmatpush.msra.mxu0 0.0
  %121 = vmatpush.msra.mxu0 0.0
  %122 = vmatpush.msra.mxu0 0.0
  %123 = vmatpush.msra.mxu0 %v26
  %124 = vmatmul.f32.gmra.mxu0 %v85
  %v125 = vpop.f32.mrf.mxu0
  %v126 = vadd.f32 %v46, %v125
  %127 = vmatmul.f32.gmra.mxu0 %v88
  %v128 = vpop.f32.mrf.mxu0
  %v129 = vadd.f32 %v51, %v128
  %130 = vmatmul.f32.gmra.mxu0 %v91
  %v131 = vpop.f32.mrf.mxu0
  %v132 = vadd.f32 %v56, %v131
  %133 = vmatmul.f32.gmra.mxu0 %v94
  %v134 = vpop.f32.mrf.mxu0
  %v135 = vadd.f32 %v61, %v134
  %136 = vmatmul.f32.gmra.mxu0 %v97
  %v137 = vpop.f32.mrf.mxu0
  %v138 = vadd.f32 %v66, %v137
  %139 = vmatmul.f32.gmra.mxu0 %v100
  %v140 = vpop.f32.mrf.mxu0
  %v141 = vadd.f32 %v71, %v140
  %142 = vmatmul.f32.gmra.mxu0 %v103
  %v143 = vpop.f32.mrf.mxu0
  %v144 = vadd.f32 %v76, %v143
  %145 = vmatmul.f32.gmra.mxu0 %v106
  %v146 = vpop.f32.mrf.mxu0
  %v147 = vadd.f32 %v81, %v146
  %148 = vdwg.mxu0
  %v149 = vmax.f32 %v126, 0.0
  %v150 = vmax.f32 %v129, 0.0
  %v151 = vmax.f32 %v132, 0.0
  %v152 = vmax.f32 %v135, 0.0
  %v153 = vmax.f32 %v138, 0.0
  %v154 = vmax.f32 %v141, 0.0
  %v155 = vmax.f32 %v144, 0.0
  %v156 = vmax.f32 %v147, 0.0
  %v157 = vld [vmem:[%s3] sm:$0xff]
  %v158 = vld [vmem:[%s3 + $0x8] sm:$0xff]
  %v159 = vld [vmem:[%s3 + $0x10] sm:$0xff]
  %v160 = vld [vmem:[%s3 + $0x18] sm:$0xff]
  %v161 = vld [vmem:[%s3 + $0x20] sm:$0xff]
  %v162 = vld [vmem:[%s3 + $0x28] sm:$0xff]
  %v163 = vld [vmem:[%s3 + $0x30] sm:$0xff]
  %v164 = vld [vmem:[%s3 + $0x38] sm:$0xff]
  %v165 = vld [vmem:[%s4] sm:$0xff]
  %v166 = vld [vmem:[%s4 + $0x8] sm:$0xff]
  %v167 = vld [vmem:[%s4 + $0x10] sm:$0xff]
  %v168 = vld [vmem:[%s4 + $0x18] sm:$0xff]
  %v169 = vld [vmem:[%s4 + $0x20] sm:$0xff]
  %v170 = vld [vmem:[%s4 + $0x28] sm:$0xff]
  %v171 = vld [vmem:[%s4 + $0x30] sm:$0xff]
  %v172 = vld [vmem:[%s4 + $0x38] sm:$0xff]
  %174 = vset.pattern.permute.xlu0 0
  %175 = vperm.xlu0 %174, %v165
  %v176 = vpop.permute.xlu0 %175
  %179 = vset.pattern.permute.xlu0 0
  %180 = vperm.xlu0 %179, %v166
  %v181 = vpop.permute.xlu0 %180
  %184 = vset.pattern.permute.xlu0 0
  %185 = vperm.xlu0 %184, %v167
  %v186 = vpop.permute.xlu0 %185
  %189 = vset.pattern.permute.xlu0 0
  %190 = vperm.xlu0 %189, %v168
  %v191 = vpop.permute.xlu0 %190
  %194 = vset.pattern.permute.xlu0 0
  %195 = vperm.xlu0 %194, %v169
  %v196 = vpop.permute.xlu0 %195
  %199 = vset.pattern.permute.xlu0 0
  %200 = vperm.xlu0 %199, %v170
  %v201 = vpop.permute.xlu0 %200
  %204 = vset.pattern.permute.xlu0 0
  %205 = vperm.xlu0 %204, %v171
  %v206 = vpop.permute.xlu0 %205
  %209 = vset.pattern.permute.xlu0 0
  %210 = vperm.xlu0 %209, %v172
  %v211 = vpop.permute.xlu0 %210
  %vm213 = vcmask 523264
  %v215 = vsel %vm213, %v157, 0
  %v218 = vsel %vm213, %v158, 0
  %v221 = vsel %vm213, %v159, 0
  %v224 = vsel %vm213, %v160, 0
  %v227 = vsel %vm213, %v161, 0
  %v230 = vsel %vm213, %v162, 0
  %v233 = vsel %vm213, %v163, 0
  %v236 = vsel %vm213, %v164, 0
  %238 = vmatpush.msra.mxu0 0.0
  %239 = vmatpush.msra.mxu0 0.0
  %240 = vmatpush.msra.mxu0 0.0
  %241 = vmatpush.msra.mxu0 0.0
  %242 = vmatpush.msra.mxu0 0.0
  %243 = vmatpush.msra.mxu0 0.0
  %244 = vmatpush.msra.mxu0 0.0
  %245 = vmatpush.msra.mxu0 0.0
  %246 = vmatpush.msra.mxu0 %v156
  %247 = vmatpush.msra.mxu0 %v155
  %248 = vmatpush.msra.mxu0 %v154
  %249 = vmatpush.msra.mxu0 %v153
  %250 = vmatpush.msra.mxu0 %v152
  %251 = vmatpush.msra.mxu0 %v151
  %252 = vmatpush.msra.mxu0 %v150
  %253 = vmatpush.msra.mxu0 %v149
  %254 = vmatmul.f32.gmra.mxu0 %v215
  %v255 = vpop.f32.mrf.mxu0
  %v256 = vadd.f32 %v176, %v255
  %257 = vmatmul.f32.gmra.mxu0 %v218
  %v258 = vpop.f32.mrf.mxu0
  %v259 = vadd.f32 %v181, %v258
  %260 = vmatmul.f32.gmra.mxu0 %v221
  %v261 = vpop.f32.mrf.mxu0
  %v262 = vadd.f32 %v186, %v261
  %263 = vmatmul.f32.gmra.mxu0 %v224
  %v264 = vpop.f32.mrf.mxu0
  %v265 = vadd.f32 %v191, %v264
  %266 = vmatmul.f32.gmra.mxu0 %v227
  %v267 = vpop.f32.mrf.mxu0
  %v268 = vadd.f32 %v196, %v267
  %269 = vmatmul.f32.gmra.mxu0 %v230
  %v270 = vpop.f32.mrf.mxu0
  %v271 = vadd.f32 %v201, %v270
  %272 = vmatmul.f32.gmra.mxu0 %v233
  %v273 = vpop.f32.mrf.mxu0
  %v274 = vadd.f32 %v206, %v273
  %275 = vmatmul.f32.gmra.mxu0 %v236
  %v276 = vpop.f32.mrf.mxu0
  %v277 = vadd.f32 %v211, %v276
  %278 = vdwg.mxu0
  %v279 = vmax.f32 %v256, 0.0
  %v280 = vmax.f32 %v259, 0.0
  %v281 = vmax.f32 %v262, 0.0
  %v282 = vmax.f32 %v265, 0.0
  %v283 = vmax.f32 %v268, 0.0
  %v284 = vmax.f32 %v271, 0.0
  %v285 = vmax.f32 %v274, 0.0
  %v286 = vmax.f32 %v277, 0.0
  %v287 = vld [vmem:[%s5] sm:$0xff]
  %v288 = vld [vmem:[%s6] sm:$0xff]
  %290 = vset.pattern.permute.xlu0 0
  %291 = vperm.xlu0 %290, %v288
  %v292 = vpop.permute.xlu0 %291
  %v295 = vsel %vm213, %v287, 0
  %297 = vmatpush.msra.mxu0 0.0
  %298 = vmatpush.msra.mxu0 0.0
  %299 = vmatpush.msra.mxu0 0.0
  %300 = vmatpush.msra.mxu0 0.0
  %301 = vmatpush.msra.mxu0 0.0
  %302 = vmatpush.msra.mxu0 0.0
  %303 = vmatpush.msra.mxu0 0.0
  %304 = vmatpush.msra.mxu0 0.0
  %305 = vmatpush.msra.mxu0 %v286
  %306 = vmatpush.msra.mxu0 %v285
  %307 = vmatpush.msra.mxu0 %v284
  %308 = vmatpush.msra.mxu0 %v283
  %309 = vmatpush.msra.mxu0 %v282
  %310 = vmatpush.msra.mxu0 %v281
  %311 = vmatpush.msra.mxu0 %v280
  %312 = vmatpush.msra.mxu0 %v279
  %313 = vmatmul.f32.gmra.mxu0 %v295
  %v314 = vpop.f32.mrf.mxu0
  %v315 = vadd.f32 %v292, %v314
  %316 = vdwg.mxu0
  %317 = vst [vmem:[%s7] sm:$0xff] %v315
  // Predicated region
  $region30: #{neural_network_forward.1} parent=0 // pred_check
    _
  $region31: #{neural_network_forward.1} parent=0 // pred_check_branch
    %319 = sbr.rel (0) target = $region33
  $region32: #{neural_network_forward.1} parent=0 // pred_region
    _
  $region33: #{neural_network_forward.1} parent=0 // pred_fallthru
    _
  // Predicated region
  $region34: #{neural_network_forward.1} parent=0 // pred_check
    _
  $region35: #{neural_network_forward.1} parent=0 // pred_check_branch
    %321 = sbr.rel (0) target = $region37
  $region36: #{neural_network_forward.1} parent=0 // pred_region
    _
  $region37: #{neural_network_forward.1} parent=0 // pred_fallthru
    _

</llo_original>
